<compile_context>
chip_gen: v6e
topology: v6e:2x2x1
jax: 0.10.0
libtpu: 0.0.40
codegen_flags: <defaults>
</compile_context>

<pallas_src>
import jax
import jax.numpy as jnp
import numpy as np
from jax.experimental import pallas as pl
from jax.experimental.pallas import tpu as pltpu


def _bandpass_kernel(means_ref, stds_ref, freqs_ref, basis_ref, out_ref, acc_ref):
    # means_ref / stds_ref : (TILE_M, 1)        -- flattened (batch*events) rows
    # freqs_ref            : (1, TILE_NC)
    # basis_ref            : (TILE_NC, TILE_T)  -- spec folded into irfft basis
    # out_ref              : (TILE_M, TILE_T)
    # acc_ref              : (TILE_M, TILE_T) f32 accumulator (VMEM scratch)
    k = pl.program_id(2)

    @pl.when(k == 0)
    def _():
        acc_ref[...] = jnp.zeros_like(acc_ref)

    mu = means_ref[...]                                          # (TILE_M, 1)
    inv_s = pl.reciprocal(stds_ref[...] + 1e-8, approx=True)     # EUP slot
    z = (freqs_ref[...] - mu) * inv_s                            # (TILE_M, TILE_NC)
    filt = jnp.exp(-0.5 * z * z)                                 # EUP transcendental

    acc_ref[...] += jnp.dot(filt, basis_ref[...],
                            preferred_element_type=jnp.float32)  # MXU

    @pl.when(k == pl.num_programs(2) - 1)
    def _():
        out_ref[...] = acc_ref[...].astype(out_ref.dtype)


def _round_up(x, m):
    return (x + m - 1) // m * m


def _pick_tile(total, candidates=(512, 256, 128)):
    for c in candidates:
        if total % c == 0:
            return c
    return total   # full-extent block (allowed when not a multiple of 128)


def band_pass_filtered_noise(means, stds, noise, n_samples):
    """means, stds: (batch, n_events); noise: (1, n_atoms, n_samples), n_atoms==1."""
    batch, n_events = means.shape
    assert means.shape == stds.shape
    n_atoms = noise.shape[1]
    assert n_atoms == 1  # TODO(synk): general n_atoms broadcast (torch only broadcasts when n_atoms==1)

    rows = batch * n_events
    n_coeffs = n_samples // 2 + 1
    nc_pad = _round_up(n_coeffs, 128)

    # ---- rfft of the single shared noise row (1 x n_samples -> tiny, plain JAX) ----
    spec = jnp.fft.rfft(noise.reshape(n_samples).astype(jnp.float32))     # (n_coeffs,)

    # ---- fold spec into the real irfft basis: out = filt @ basis -------------------
    #   irfft(spec*filt)[t] = sum_k (w_k/N) * filt[k]
    #                         * (Re(spec_k)*cos(2*pi*k*t/N) - Im(spec_k)*sin(2*pi*k*t/N))
    # Hermitian weights: w=1 at k=0 and (for even N only) at the Nyquist bin, else 2.
    t_idx = np.arange(n_samples)[None, :].astype(np.float64)
    k_idx = np.arange(n_coeffs)[:, None].astype(np.float64)
    ang = 2.0 * np.pi * k_idx * t_idx / n_samples                         # (n_coeffs, n_samples)
    w = np.full((n_coeffs,), 2.0)
    w[0] = 1.0
    if n_samples % 2 == 0:
        w[-1] = 1.0
    cos_b = jnp.asarray((w[:, None] / n_samples) * np.cos(ang), jnp.float32)
    sin_b = jnp.asarray((w[:, None] / n_samples) * np.sin(ang), jnp.float32)
    basis = jnp.real(spec)[:, None] * cos_b - jnp.imag(spec)[:, None] * sin_b
    basis = jnp.pad(basis, ((0, nc_pad - n_coeffs), (0, 0)))              # (nc_pad, n_samples)

    freqs = jnp.pad(jnp.linspace(0.0, 1.0, n_coeffs, dtype=jnp.float32),
                    (0, nc_pad - n_coeffs))[None, :]                      # (1, nc_pad)

    # ---- flatten (batch, events) into an MXU-height row axis -----------------------
    if rows <= 128:
        tile_m = _round_up(rows, 8)
        rows_pad = tile_m
    else:
        tile_m = 128
        rows_pad = _round_up(rows, 128)
    m_flat = jnp.zeros((rows_pad, 1), jnp.float32).at[:rows, 0].set(
        means.reshape(rows).astype(jnp.float32))
    s_flat = jnp.ones((rows_pad, 1), jnp.float32).at[:rows, 0].set(
        stds.reshape(rows).astype(jnp.float32))

    tile_t = _pick_tile(n_samples)
    tile_nc = _pick_tile(nc_pad)
    grid = (rows_pad // tile_m, n_samples // tile_t, nc_pad // tile_nc)

    # Explicit scoped-VMEM budget from the chosen tiles (double-buffered inputs/output
    # + the accumulator), with generous headroom but well under v7x's 64 MiB.
    vmem_est = 4 * (2 * (2 * tile_m + tile_nc + tile_nc * tile_t + tile_m * tile_t)
                    + tile_m * tile_t)
    vmem_limit = int(min(100 << 20, max(2 * vmem_est, 16 << 20)))

    out_flat = pl.pallas_call(
        _bandpass_kernel,
        out_shape=jax.ShapeDtypeStruct((rows_pad, n_samples), jnp.float32),
        grid=grid,
        in_specs=[
            pl.BlockSpec((tile_m, 1), lambda i, j, k: (i, 0)),        # means (rows, 1)
            pl.BlockSpec((tile_m, 1), lambda i, j, k: (i, 0)),        # stds  (rows, 1)
            pl.BlockSpec((1, tile_nc), lambda i, j, k: (0, k)),       # freqs
            pl.BlockSpec((tile_nc, tile_t), lambda i, j, k: (k, j)),  # folded irfft basis
        ],
        out_specs=pl.BlockSpec((tile_m, tile_t), lambda i, j, k: (i, j)),
        scratch_shapes=[pltpu.VMEM((tile_m, tile_t), jnp.float32)],
        compiler_params=pltpu.CompilerParams(
            dimension_semantics=("parallel", "parallel", "arbitrary"),
            vmem_limit_bytes=vmem_limit),
    )(m_flat, s_flat, freqs, basis)

    return out_flat[:rows].reshape(batch, n_events, n_samples)


def _reference(means, stds, noise, n_samples):
    """Pure-JAX reference of gaussian_bandpass_filtered (FFT based)."""
    spec = jnp.fft.rfft(noise, axis=-1)                      # (1, 1, n_coeffs)
    n_coeffs = spec.shape[-1]
    freqs = jnp.linspace(0.0, 1.0, n_coeffs)[None, None, :]
    filt = jnp.exp(-0.5 * ((freqs - means[..., None]) / (stds[..., None] + 1e-8)) ** 2)
    return jnp.fft.irfft(spec * filt, n=n_samples, axis=-1).astype(jnp.float32)


class BandPassFilteredNoise:
    """JAX/Pallas port of the PyTorch module."""

    def __init__(self, n_samples: int, n_atoms: int = 1):
        self.n_samples = n_samples
        self.n_atoms = n_atoms

    def __call__(self, means, stds, *, key):
        batch, n_events = means.shape
        # torch: torch.zeros(1, n_atoms, n_samples).uniform_(-1, 1)
        noise = jax.random.uniform(key, (1, self.n_atoms, self.n_samples),
                                   minval=-1.0, maxval=1.0, dtype=jnp.float32)
        out = band_pass_filtered_noise(means, stds, noise, self.n_samples)
        assert out.shape == (batch, n_events, self.n_samples)
        return out, noise


if __name__ == "__main__":
    key = jax.random.PRNGKey(0)
    k_m, k_s, k_n = jax.random.split(key, 3)

    batch, n_events, n_samples = 2, 4, 128
    means = jax.random.uniform(k_m, (batch, n_events), minval=0.01, maxval=0.5,
                               dtype=jnp.float32)
    stds = jax.random.uniform(k_s, (batch, n_events), minval=0.01, maxval=0.1,
                              dtype=jnp.float32)

    module = BandPassFilteredNoise(n_samples=n_samples, n_atoms=1)
    out, noise = module(means, stds, key=k_n)
    out = jax.block_until_ready(out)

    ref = jax.block_until_ready(_reference(means, stds, noise, n_samples))
    np.testing.assert_allclose(np.asarray(out), np.asarray(ref), rtol=1e-2, atol=2e-3)

    print("KERNEL_OK")
</pallas_src>

<mosaic_0001>
module attributes {stable_mosaic.version = 11 : i64} {
  func.func @_bandpass_kernel(%arg0: i32, %arg1: i32, %arg2: i32, %arg3: memref<8x1xf32, #tpu.memory_space<vmem>>, %arg4: memref<8x1xf32, #tpu.memory_space<vmem>>, %arg5: memref<1x128xf32, #tpu.memory_space<vmem>>, %arg6: memref<128x128xf32, #tpu.memory_space<vmem>>, %arg7: memref<8x128xf32, #tpu.memory_space<vmem>>, %arg8: memref<8x128xf32, #tpu.memory_space<vmem>>) attributes {dimension_semantics = [#tpu.dimension_semantics<parallel>, #tpu.dimension_semantics<parallel>, #tpu.dimension_semantics<arbitrary>], iteration_bounds = array<i64: 1, 1, 1>, scalar_prefetch = 0 : i64, scratch_operands = 1 : i64, tpu.core_type = #tpu.core_type<tc>, window_params = [{transform_indices = @transform_0, window_bounds = array<i64: 8, 1>}, {transform_indices = @transform_1, window_bounds = array<i64: 8, 1>}, {transform_indices = @transform_2, window_bounds = array<i64: 1, 128>}, {transform_indices = @transform_3, window_bounds = array<i64: 128, 128>}, {transform_indices = @transform_4, window_bounds = array<i64: 8, 128>}]} {
    %c0_i32 = arith.constant 0 : i32
    %0 = arith.cmpi eq, %arg2, %c0_i32 : i32
    %1 = arith.extui %0 : i1 to i32
    %c0_i32_0 = arith.constant 0 : i32
    %2 = arith.cmpi ne, %1, %c0_i32_0 : i32
    scf.if %2 {
      %cst_16 = arith.constant 0.000000e+00 : f32
      %26 = vector.broadcast %cst_16 : f32 to vector<8x128xf32>
      %c0_17 = arith.constant 0 : index
      %c0_18 = arith.constant 0 : index
      %27 = vector.load %arg8[%c0_17, %c0_18] : memref<8x128xf32, #tpu.memory_space<vmem>>, vector<8x128xf32>
      tpu.vector_store %arg8[%c0_17, %c0_18], %26 {strides = array<i32>} : memref<8x128xf32, #tpu.memory_space<vmem>>, vector<8x128xf32>,
    } else {
    }
    %c0 = arith.constant 0 : index
    %c0_1 = arith.constant 0 : index
    %3 = vector.load %arg3[%c0, %c0_1] : memref<8x1xf32, #tpu.memory_space<vmem>>, vector<8x1xf32>
    %c0_2 = arith.constant 0 : index
    %c0_3 = arith.constant 0 : index
    %4 = vector.load %arg4[%c0_2, %c0_3] : memref<8x1xf32, #tpu.memory_space<vmem>>, vector<8x1xf32>
    %cst = arith.constant 9.99999993E-9 : f32
    %5 = vector.broadcast %cst : f32 to vector<8x1xf32>
    %6 = arith.addf %4, %5 : vector<8x1xf32>
    %7 = tpu.reciprocal %6 {approx = true} : vector<8x1xf32> -> vector<8x1xf32>
    %c0_4 = arith.constant 0 : index
    %c0_5 = arith.constant 0 : index
    %8 = vector.load %arg5[%c0_4, %c0_5] : memref<1x128xf32, #tpu.memory_space<vmem>>, vector<1x128xf32>
    %9 = vector.broadcast %8 : vector<1x128xf32> to vector<8x128xf32>
    %10 = vector.broadcast %3 : vector<8x1xf32> to vector<8x128xf32>
    %11 = arith.subf %9, %10 : vector<8x128xf32>
    %12 = vector.broadcast %7 : vector<8x1xf32> to vector<8x128xf32>
    %13 = arith.mulf %11, %12 : vector<8x128xf32>
    %cst_6 = arith.constant -5.000000e-01 : f32
    %14 = vector.broadcast %cst_6 : f32 to vector<8x128xf32>
    %15 = arith.mulf %14, %13 : vector<8x128xf32>
    %16 = arith.mulf %15, %13 : vector<8x128xf32>
    %17 = math.exp %16 : vector<8x128xf32>
    %c0_7 = arith.constant 0 : index
    %c0_8 = arith.constant 0 : index
    %18 = vector.load %arg8[%c0_7, %c0_8] : memref<8x128xf32, #tpu.memory_space<vmem>>, vector<8x128xf32>
    %c0_9 = arith.constant 0 : index
    %c0_10 = arith.constant 0 : index
    %19 = vector.load %arg6[%c0_9, %c0_10] : memref<128x128xf32, #tpu.memory_space<vmem>>, vector<128x128xf32>
    %cst_11 = arith.constant dense<0.000000e+00> : vector<8x128xf32>
    %20 = tpu.matmul %17, %19, %cst_11 {dimension_numbers = #tpu.dot_dimension_numbers<[1], [0], [0], [1], [0, 0, 1, 1], [], []>} : vector<8x128xf32>, vector<128x128xf32>, vector<8x128xf32> -> vector<8x128xf32>
    %21 = arith.addf %18, %20 : vector<8x128xf32>
    %c0_12 = arith.constant 0 : index
    %c0_13 = arith.constant 0 : index
    %22 = vector.load %arg8[%c0_12, %c0_13] : memref<8x128xf32, #tpu.memory_space<vmem>>, vector<8x128xf32>
    tpu.vector_store %arg8[%c0_12, %c0_13], %21 {strides = array<i32>} : memref<8x128xf32, #tpu.memory_space<vmem>>, vector<8x128xf32>,
    %c0_i32_14 = arith.constant 0 : i32
    %23 = arith.cmpi eq, %arg2, %c0_i32_14 : i32
    %24 = arith.extui %23 : i1 to i32
    %c0_i32_15 = arith.constant 0 : i32
    %25 = arith.cmpi ne, %24, %c0_i32_15 : i32
    scf.if %25 {
      %c0_16 = arith.constant 0 : index
      %c0_17 = arith.constant 0 : index
      %26 = vector.load %arg8[%c0_16, %c0_17] : memref<8x128xf32, #tpu.memory_space<vmem>>, vector<8x128xf32>
      %c0_18 = arith.constant 0 : index
      %c0_19 = arith.constant 0 : index
      %27 = vector.load %arg7[%c0_18, %c0_19] : memref<8x128xf32, #tpu.memory_space<vmem>>, vector<8x128xf32>
      tpu.vector_store %arg7[%c0_18, %c0_19], %26 {strides = array<i32>} : memref<8x128xf32, #tpu.memory_space<vmem>>, vector<8x128xf32>,
    } else {
    }
    return
  }
  func.func @transform_0(%arg0: i32, %arg1: i32, %arg2: i32) -> (i32, i32) {
    %c0_i32 = arith.constant 0 : i32
    %c0_i32_0 = arith.constant 0 : i32
    return %arg0, %c0_i32 : i32, i32
  }
  func.func @transform_1(%arg0: i32, %arg1: i32, %arg2: i32) -> (i32, i32) {
    %c0_i32 = arith.constant 0 : i32
    %c0_i32_0 = arith.constant 0 : i32
    return %arg0, %c0_i32 : i32, i32
  }
  func.func @transform_2(%arg0: i32, %arg1: i32, %arg2: i32) -> (i32, i32) {
    %c0_i32 = arith.constant 0 : i32
    %c0_i32_0 = arith.constant 0 : i32
    return %c0_i32, %arg2 : i32, i32
  }
  func.func @transform_3(%arg0: i32, %arg1: i32, %arg2: i32) -> (i32, i32) {
    %c0_i32 = arith.constant 0 : i32
    return %arg2, %arg1 : i32, i32
  }
  func.func @transform_4(%arg0: i32, %arg1: i32, %arg2: i32) -> (i32, i32) {
    %c0_i32 = arith.constant 0 : i32
    return %arg0, %arg1 : i32, i32
  }
}

</mosaic_0001>

<llo_original>
// kernel: tpu_custom_call.1
$region0: #{tpu_custom_call.1}
  #allocation0 [shape = 'u32[]', space=smem, size = 0x4, offset = 0x4, fixed_abs, tag = 'smem constant byte address 0x4 - core index']
  #allocation1 [shape = 'u32[144,128]{1,0:T(1,128)}', space=vmem, size = 0x12000, scoped, tag = 'internal scratch']
  #allocation2 [shape = 'f32[8,128]{1,0:T(8,128)}', space=vmem, size = 0x1000, scoped, tag = 'scratch operand']
  %s0 = inlined_call_operand.vmem [shape: f32[8,1], index: 0, kind: input, shape index: {}]
  %s1 = inlined_call_operand.vmem [shape: f32[8,1], index: 1, kind: input, shape index: {}]
  %s2 = inlined_call_operand.vmem [shape: f32[1,128], index: 2, kind: input, shape index: {}]
  %s3 = inlined_call_operand.hbm [shape: f32[128,128], index: 3, kind: input, shape index: {}]
  %s4 = inlined_call_operand.hbm [shape: f32[8,128], index: 4, kind: output, shape index: {}]
  %s5 = sld [smem:[#allocation0]]
  $region38: #{tpu_custom_call.1} parent=0
    _
  %s7 = ssub.s32 1, %s5
  %s8 = scalar_select 0, %s7, %s5
  $region1: #{tpu_custom_call.1} parent=0
    #allocation3 [shape = 'u8[65536]{0}', space=vmem, size = 0x10000, scoped, tag = 'input window, operand 3, single buffered']
    #allocation4 [shape = 's32[1]{0}', space=sflag, size = 0x4, scoped, tag = 'scoped memory for tpu_custom_call.1']
    #allocation5 [shape = 's32[1]{0}', space=sflag, size = 0x4, scoped, tag = 'scoped memory for tpu_custom_call.1']
    #allocation6 [shape = 'u8[4096]{0}', space=vmem, size = 0x1000, scoped, tag = 'output window, operand 0, single buffered']
    %9 = vsyncpa [#allocation4], 0
    %10 = vsyncpa [#allocation5], 0
    // Predicated region
    $region2: #{tpu_custom_call.1} parent=1 // pred_check
      _
    $region3: #{tpu_custom_call.1} parent=1 // pred_check_branch
      %12 = sbr.rel (0) target = $region5
    $region4: #{tpu_custom_call.1} parent=1 // pred_region
      _
    $region5: #{tpu_custom_call.1} parent=1 // pred_fallthru
      _
    // Predicated region
    $region6: #{tpu_custom_call.1} parent=1 // pred_check
      _
    $region7: #{tpu_custom_call.1} parent=1 // pred_check_branch
      %14 = sbr.rel (0) target = $region9
    $region8: #{tpu_custom_call.1} parent=1 // pred_region
      _
    $region9: #{tpu_custom_call.1} parent=1 // pred_fallthru
      _
    // Predicated region
    $region10: #{tpu_custom_call.1} parent=1 // pred_check
      _
    $region11: #{tpu_custom_call.1} parent=1 // pred_check_branch
      %16 = sbr.rel (0) target = $region13
    $region12: #{tpu_custom_call.1} parent=1 // pred_region
      _
    $region13: #{tpu_custom_call.1} parent=1 // pred_fallthru
      _
    // Predicated region
    $region14: #{tpu_custom_call.1} parent=1 // pred_check
      _
    $region15: #{tpu_custom_call.1} parent=1 // pred_check_branch
      %18 = sbr.rel (0) target = $region17
    $region16: #{tpu_custom_call.1} parent=1 // pred_region
      %s20 = ssub.s32 2048, 2048
      %21 = vsyncadd [#allocation4], %s20
      %s22 = sshll.u32 [#allocation3], 4
      %s23 = int_to_ptr.vmem [resolvable:$true] %s22
      %28 = dma.hbm_to_vmem [thread:$0]  %s3, 2048, %s23, [#allocation4], 128, 128, 8
    $region17: #{tpu_custom_call.1} parent=1 // pred_fallthru
      _
    // Predicated region
    $region18: #{tpu_custom_call.1} parent=1 // pred_check
      _
    $region19: #{tpu_custom_call.1} parent=1 // pred_check_branch
      %30 = sbr.rel (0) target = $region21
    $region20: #{tpu_custom_call.1} parent=1 // pred_region
      %31 = dma.done [#allocation4], 2048
    $region21: #{tpu_custom_call.1} parent=1 // pred_fallthru
      _
    %p32 = scmp.eq.s32.totalorder 0, 0
    // Predicated region
    $region22: #{tpu_custom_call.1} parent=1 // pred_check
      %p33 = pneg %p32
    $region23: #{tpu_custom_call.1} parent=1 // pred_check_branch
      %35 = sbr.rel (%p33) target = $region25
    $region24: #{tpu_custom_call.1} parent=1 // pred_region
      %36 = vst [vmem:[#allocation2] sm:$0xff] 0.0
    $region25: #{tpu_custom_call.1} parent=1 // pred_fallthru
      _
    %v37 = vld [vmem:[%s0] sm:$0xff]
    %v38 = vld [vmem:[%s1] sm:$0xff]
    %v39 = vadd.f32 %v38, 1e-08
    %v40 = vrcp.pop %v39
    %v41 = vld [vmem:[%s2] sm:$0x1]
    %v43 = vlaneseq
    %v44 = vshrl.u32 %v43, 7
    %v45 = vsub.s32 0, %v44
    %v46 = vrot.slane %v41, %v45
    %49 = vset.pattern.permute.xlu0 0
    %50 = vperm.xlu0 %49, %v37
    %v51 = vpop.permute.xlu0 %50
    %v53 = vsub.f32 %v46, %v51
    %55 = vset.pattern.permute.xlu0 0
    %56 = vperm.xlu0 %55, %v40
    %v57 = vpop.permute.xlu0 %56
    %v59 = vmul.f32 %v53, %v57
    %v60 = vmul.f32 %v59, -0.5
    %v61 = vmul.f32 %v60, %v59
    %v62 = vmul.f32 %v61, 1.442695
    %v63 = vpow.pop %v62
    %v64 = vld [vmem:[#allocation2] sm:$0xff]
    %v65 = vld [vmem:[#allocation3] sm:$0xff]
    %v66 = vld [vmem:[#allocation3 + $0x8] sm:$0xff]
    %v67 = vld [vmem:[#allocation3 + $0x10] sm:$0xff]
    %v68 = vld [vmem:[#allocation3 + $0x18] sm:$0xff]
    %v69 = vld [vmem:[#allocation3 + $0x20] sm:$0xff]
    %v70 = vld [vmem:[#allocation3 + $0x28] sm:$0xff]
    %v71 = vld [vmem:[#allocation3 + $0x30] sm:$0xff]
    %v72 = vld [vmem:[#allocation3 + $0x38] sm:$0xff]
    %v73 = vld [vmem:[#allocation3 + $0x40] sm:$0xff]
    %v74 = vld [vmem:[#allocation3 + $0x48] sm:$0xff]
    %v75 = vld [vmem:[#allocation3 + $0x50] sm:$0xff]
    %v76 = vld [vmem:[#allocation3 + $0x58] sm:$0xff]
    %v77 = vld [vmem:[#allocation3 + $0x60] sm:$0xff]
    %v78 = vld [vmem:[#allocation3 + $0x68] sm:$0xff]
    %v79 = vld [vmem:[#allocation3 + $0x70] sm:$0xff]
    %v80 = vld [vmem:[#allocation3 + $0x78] sm:$0xff]
    %81 = vmatprep.subr.mxu0 0.0
    %82 = vmatpush1.msra.mxu0 %v80
    %83 = vmatprep.subr.mxu0 0.0
    %84 = vmatpush1.msra.mxu0 %v79
    %85 = vmatprep.subr.mxu0 0.0
    %86 = vmatpush1.msra.mxu0 %v78
    %87 = vmatprep.subr.mxu0 0.0
    %88 = vmatpush1.msra.mxu0 %v77
    %89 = vmatprep.subr.mxu0 0.0
    %90 = vmatpush1.msra.mxu0 %v76
    %91 = vmatprep.subr.mxu0 0.0
    %92 = vmatpush1.msra.mxu0 %v75
    %93 = vmatprep.subr.mxu0 0.0
    %94 = vmatpush1.msra.mxu0 %v74
    %95 = vmatprep.subr.mxu0 0.0
    %96 = vmatpush1.msra.mxu0 %v73
    %97 = vmatprep.subr.mxu0 0.0
    %98 = vmatpush1.msra.mxu0 %v72
    %99 = vmatprep.subr.mxu0 0.0
    %100 = vmatpush1.msra.mxu0 %v71
    %101 = vmatprep.subr.mxu0 0.0
    %102 = vmatpush1.msra.mxu0 %v70
    %103 = vmatprep.subr.mxu0 0.0
    %104 = vmatpush1.msra.mxu0 %v69
    %105 = vmatprep.subr.mxu0 0.0
    %106 = vmatpush1.msra.mxu0 %v68
    %107 = vmatprep.subr.mxu0 0.0
    %108 = vmatpush1.msra.mxu0 %v67
    %109 = vmatprep.subr.mxu0 0.0
    %110 = vmatpush1.msra.mxu0 %v66
    %111 = vmatprep.subr.mxu0 0.0
    %112 = vmatpush1.msra.mxu0 %v65
    %113 = vmatprep.subr.mxu0 0.0
    %114 = vmatpush2.msra.mxu0 0.0
    %115 = vmatprep.subr.mxu0 0.0
    %116 = vmatpush2.msra.mxu0 0.0
    %117 = vmatprep.subr.mxu0 0.0
    %118 = vmatpush2.msra.mxu0 0.0
    %119 = vmatprep.subr.mxu0 0.0
    %120 = vmatpush2.msra.mxu0 0.0
    %121 = vmatprep.subr.mxu0 0.0
    %122 = vmatpush2.msra.mxu0 0.0
    %123 = vmatprep.subr.mxu0 0.0
    %124 = vmatpush2.msra.mxu0 0.0
    %125 = vmatprep.subr.mxu0 0.0
    %126 = vmatpush2.msra.mxu0 0.0
    %127 = vmatprep.subr.mxu0 0.0
    %128 = vmatpush2.msra.mxu0 0.0
    %129 = vmatprep.subr.mxu0 0.0
    %130 = vmatpush2.msra.mxu0 0.0
    %131 = vmatprep.subr.mxu0 0.0
    %132 = vmatpush2.msra.mxu0 0.0
    %133 = vmatprep.subr.mxu0 0.0
    %134 = vmatpush2.msra.mxu0 0.0
    %135 = vmatprep.subr.mxu0 0.0
    %136 = vmatpush2.msra.mxu0 0.0
    %137 = vmatprep.subr.mxu0 0.0
    %138 = vmatpush2.msra.mxu0 0.0
    %139 = vmatprep.subr.mxu0 0.0
    %140 = vmatpush2.msra.mxu0 0.0
    %141 = vmatprep.subr.mxu0 0.0
    %142 = vmatpush2.msra.mxu0 0.0
    %143 = vmatprep.subr.mxu0 0.0
    %144 = vmatpush2.msra.mxu0 0.0
    %145 = vmatprep.mubr.f32.mxu0 0.0
    %146 = vmatmul.mubr.f32.gmra.mxu0 %v63
    %v147 = vpop.f32.mrf.mxu0
    %v148 = vadd.f32 0.0, %v147
    %v149 = vpop.f32.mrf.mxu0
    %150 = vdwg.mxu0
    %v151 = vadd.f32 %v64, %v148
    %152 = vst [vmem:[#allocation2] sm:$0xff] %v151
    // Predicated region
    $region26: #{tpu_custom_call.1} parent=1 // pred_check
      %p153 = pneg %p32
    $region27: #{tpu_custom_call.1} parent=1 // pred_check_branch
      %155 = sbr.rel (%p153) target = $region29
    $region28: #{tpu_custom_call.1} parent=1 // pred_region
      %v156 = vld [vmem:[#allocation2] sm:$0xff]
      %157 = vst [vmem:[#allocation6] sm:$0xff] %v156
    $region29: #{tpu_custom_call.1} parent=1 // pred_fallthru
      _
    // Predicated region
    $region30: #{tpu_custom_call.1} parent=1 // pred_check
      _
    $region31: #{tpu_custom_call.1} parent=1 // pred_check_branch
      %159 = sbr.rel (0) target = $region33
    $region32: #{tpu_custom_call.1} parent=1 // pred_region
      %s161 = ssub.s32 128, 128
      %162 = vsyncadd [#allocation5], %s161
      %s164 = sshll.u32 [#allocation6], 4
      %s165 = int_to_ptr.vmem [resolvable:$true] %s164
      %167 = dma.vmem_to_hbm [thread:$0]  %s165, 128, %s4, [#allocation5]
    $region33: #{tpu_custom_call.1} parent=1 // pred_fallthru
      _
    // Predicated region
    $region34: #{tpu_custom_call.1} parent=1 // pred_check
      _
    $region35: #{tpu_custom_call.1} parent=1 // pred_check_branch
      %169 = sbr.rel (0) target = $region37
    $region36: #{tpu_custom_call.1} parent=1 // pred_region
      %170 = dma.done [#allocation5], 128
    $region37: #{tpu_custom_call.1} parent=1 // pred_fallthru
      _
    %171 = vsyncpa [#allocation4], 1
    %172 = vsyncpa [#allocation5], 1

</llo_original>
